<compile_context>
chip_gen: v7x
topology: tpu7x:2x2x1
jax: 0.10.0
libtpu: 0.0.40
codegen_flags: <defaults>
</compile_context>

<pallas_src>
import functools

import numpy as np
import jax
import jax.numpy as jnp
from jax.experimental import pallas as pl
from jax.experimental.pallas import tpu as pltpu

HID = 32          # hid_size
N_SLOTS = 2
N_ROUNDS = 1
N_TYPES = 2
N_FEAT = N_TYPES + N_ROUNDS              # packed [prior | r] width = 3
N_COMBOS = N_TYPES * N_SLOTS * N_SLOTS   # 8 critic evaluations

# Row layout of the packed first-layer matrix W1 (N_W1_ROWS, HID).
D_P = 0      # rows 0-1 : defender affine1 weights for prior
             # row  2   : defender affine1 weight for r
             # row  3   : defender affine1 bias
A_P = 4      # rows 4-5 : attacker affine1 weights for prior
             # row  6   : attacker affine1 weight for r
             # row  7   : attacker affine1 bias
A_T = 8      # rows 8-9 : attacker affine1 weights for the type one-hot
C_P = 10     # rows 10-11: critic w1 prior, row 12: r, row 13: bias
C_T = 14     # rows 14-15: critic w1 type one-hot
C_AP = 16    # rows 16-17: critic w1 attacker action probabilities
C_AA = 18    # rows 18-19: critic w1 attacker action one-hot
C_DP = 20    # rows 20-21: critic w1 defender action probabilities
C_DA = 22    # rows 22-23: critic w1 defender action one-hot
C_W2 = 24    # row 24    : critic affine2 weight (row form, (1, HID))
B2_ROW = 25  # row 25    : cols 0:2 dfd_b2 | cols 2:4 atk_b2 | col 4 crit_b2
N_W1_ROWS = 32   # padded to a multiple of 8 sublanes


def _softmax(z):
    m = jnp.max(z, axis=-1, keepdims=True)
    e = jnp.exp(z - m)
    return e / jnp.sum(e, axis=-1, keepdims=True)


# ------------------------------- kernel -------------------------------------

def model_kernel(is_atk, x_ref, w1_ref, w2_ref, y_ref):
    B = x_ref.shape[0]                       # batch tile (static)
    x = x_ref[...]                           # (B, 3) = [prior0, prior1, r]
    w1 = w1_ref[...]                         # (N_W1_ROWS, HID)

    p0 = x[:, 0:1]
    p1 = x[:, 1:2]
    rr = x[:, 2:3]
    # Hoisted (B, HID) broadcasts, reused by all three first layers.
    p0b = jnp.broadcast_to(p0, (B, HID))
    p1b = jnp.broadcast_to(p1, (B, HID))
    rb = jnp.broadcast_to(rr, (B, HID))

    def first_layer(base):
        # rows [base, base+1] = prior weights, base+2 = r weight, base+3 = bias
        return (p0b * w1[base:base + 1, :]
                + p1b * w1[base + 1:base + 2, :]
                + rb * w1[base + 2:base + 3, :]
                + w1[base + 3:base + 4, :])

    # ---- actors: defender + attacker (shared first layer, per-type row) ----
    h_d = jnp.maximum(first_layer(D_P), 0.0)
    a_pre = first_layer(A_P)                 # attacker prior/r part, computed once
    h_a0 = jnp.maximum(a_pre + w1[A_T:A_T + 1, :], 0.0)
    h_a1 = jnp.maximum(a_pre + w1[A_T + 1:A_T + 2, :], 0.0)

    # One fused second-layer matmul and one softmax for all three actor heads.
    h_all = jnp.concatenate([h_d, h_a0, h_a1], axis=0)           # (3B, HID)
    logits = (jnp.dot(h_all, w2_ref[...], preferred_element_type=jnp.float32)
              + w1[B2_ROW:B2_ROW + 1, 0:2 * N_SLOTS])            # (3B, 4)
    sel = jnp.concatenate(
        [logits[0:B, 0:N_SLOTS],                                 # defender cols
         logits[B:3 * B, N_SLOTS:2 * N_SLOTS]], axis=0)          # attacker cols
    probs = _softmax(sel)                                        # (3B, n_slots)
    dfd_prob = probs[0:B]
    atk_probs = (probs[B:2 * B], probs[2 * B:3 * B])

    # ---- critic: shared first-layer contribution from (prior, r, dfd_prob) ----
    c_base = (first_layer(C_P)
              + jnp.broadcast_to(dfd_prob[:, 0:1], (B, HID)) * w1[C_DP:C_DP + 1, :]
              + jnp.broadcast_to(dfd_prob[:, 1:2], (B, HID)) * w1[C_DP + 1:C_DP + 2, :])

    hcs = []       # 8 hidden tiles, one per (type, atk action, dfd action)
    wcols = []     # matching probability weights
    for t in range(N_TYPES):
        ap = atk_probs[t]
        base_t = (c_base + w1[C_T + t:C_T + t + 1, :]
                  + jnp.broadcast_to(ap[:, 0:1], (B, HID)) * w1[C_AP:C_AP + 1, :]
                  + jnp.broadcast_to(ap[:, 1:2], (B, HID)) * w1[C_AP + 1:C_AP + 2, :])
        scale = (1.0 / N_TYPES) if is_atk else (p0 if t == 0 else p1)
        for a in range(N_SLOTS):
            base_ta = base_t + w1[C_AA + a:C_AA + a + 1, :]
            wa = ap[:, a:a + 1] * scale
            for b in range(N_SLOTS):
                hcs.append(jnp.maximum(base_ta + w1[C_DA + b:C_DA + b + 1, :], 0.0))
                wcols.append(wa * dfd_prob[:, b:b + 1])

    # Critic second layer as ONE wide exact-f32 contraction over the stacked
    # (8B, HID) hidden tile instead of 8 separate lane reductions.
    hc_stack = jnp.concatenate(hcs, axis=0)                      # (8B, HID)
    w_stack = jnp.concatenate(wcols, axis=0)                     # (8B, 1)
    c_stack = (jnp.sum(hc_stack * w1[C_W2:C_W2 + 1, :], axis=-1, keepdims=True)
               + w1[B2_ROW:B2_ROW + 1, 2 * N_SLOTS:2 * N_SLOTS + 1])
    prod = c_stack * w_stack                                     # (8B, 1)

    y = prod[0:B]
    for k in range(1, N_COMBOS):
        y = y + prod[k * B:(k + 1) * B]
    y_ref[...] = y


# --------------------------- parameter setup -------------------------------

def init_linear(key, in_dim, out_dim):
    # PyTorch nn.Linear default init: U(-1/sqrt(in), 1/sqrt(in)).
    kw, kb = jax.random.split(key)
    bound = 1.0 / np.sqrt(in_dim)
    w = jax.random.uniform(kw, (out_dim, in_dim), jnp.float32, -bound, bound)
    b = jax.random.uniform(kb, (out_dim,), jnp.float32, -bound, bound)
    return w, b


def init_params(key):
    keys = jax.random.split(key, 6)
    dfd_w1, dfd_b1 = init_linear(keys[0], N_TYPES + N_ROUNDS, HID)
    dfd_w2, dfd_b2 = init_linear(keys[1], HID, N_SLOTS)
    atk_w1, atk_b1 = init_linear(keys[2], N_TYPES + N_ROUNDS + N_TYPES, HID)
    atk_w2, atk_b2 = init_linear(keys[3], HID, N_SLOTS)
    # TODO(synk): `critic` is never defined in the reference source; implement
    # it as a 2-layer MLP Linear(13->HID) -> ReLU -> Linear(HID->1) over the
    # concatenation of its seven inputs.
    crit_in = N_TYPES + N_ROUNDS + N_TYPES + 4 * N_SLOTS   # = 13
    crit_w1, crit_b1 = init_linear(keys[4], crit_in, HID)
    crit_w2, crit_b2 = init_linear(keys[5], HID, 1)
    return dict(dfd_w1=dfd_w1, dfd_b1=dfd_b1, dfd_w2=dfd_w2, dfd_b2=dfd_b2,
                atk_w1=atk_w1, atk_b1=atk_b1, atk_w2=atk_w2, atk_b2=atk_b2,
                crit_w1=crit_w1, crit_b1=crit_b1, crit_w2=crit_w2, crit_b2=crit_b2)


def pack_params(params):
    """One-time packing of PyTorch-layout params into the 2 kernel weight arrays."""
    d_w1 = params["dfd_w1"].T       # (3, HID)
    a_w1 = params["atk_w1"].T       # (5, HID)
    c_w1 = params["crit_w1"].T      # (13, HID)

    b2row = jnp.zeros((1, HID), jnp.float32)
    b2row = b2row.at[0, 0:N_SLOTS].set(params["dfd_b2"])
    b2row = b2row.at[0, N_SLOTS:2 * N_SLOTS].set(params["atk_b2"])
    b2row = b2row.at[0, 2 * N_SLOTS].set(params["crit_b2"][0])

    rows = [
        d_w1[0:2], d_w1[2:3], params["dfd_b1"].reshape(1, HID),       # rows 0-3
        a_w1[0:2], a_w1[2:3], params["atk_b1"].reshape(1, HID),       # rows 4-7
        a_w1[3:5],                                                    # rows 8-9
        c_w1[0:2], c_w1[2:3], params["crit_b1"].reshape(1, HID),      # rows 10-13
        c_w1[3:5], c_w1[5:7], c_w1[7:9], c_w1[9:11], c_w1[11:13],     # rows 14-23
        params["crit_w2"].reshape(1, HID),                            # row 24
        b2row,                                                        # row 25
    ]
    w1 = jnp.concatenate(rows, axis=0)
    w1 = jnp.pad(w1, ((0, N_W1_ROWS - w1.shape[0]), (0, 0)))          # (32, HID)
    w2 = jnp.concatenate([params["dfd_w2"].T, params["atk_w2"].T], axis=1)  # (HID, 4)
    return dict(w1=w1, w2=w2)


# ------------------------------- wrapper ------------------------------------

def _round_up(n, m):
    return ((n + m - 1) // m) * m


@functools.partial(jax.jit, static_argnames=("is_atk", "b_tile"))
def model_forward(packed, prior, r, is_atk=True, b_tile=512):
    B = prior.shape[0]
    # Lane/DMA friendly packed input: one array instead of two.
    x = jnp.concatenate([prior.astype(jnp.float32),
                         r.astype(jnp.float32)], axis=1)              # (B, 3)
    bt = min(b_tile, _round_up(B, 8))
    b_pad = _round_up(B, bt)
    if b_pad != B:
        x = jnp.pad(x, ((0, b_pad - B), (0, 0)))

    y = pl.pallas_call(
        functools.partial(model_kernel, is_atk),
        out_shape=jax.ShapeDtypeStruct((b_pad, 1), jnp.float32),
        grid_spec=pltpu.PrefetchScalarGridSpec(
            num_scalar_prefetch=0,
            grid=(b_pad // bt,),
            in_specs=[
                pl.BlockSpec((bt, N_FEAT), lambda i: (i, 0)),
                pl.BlockSpec((N_W1_ROWS, HID), lambda i: (0, 0)),
                pl.BlockSpec((HID, 2 * N_SLOTS), lambda i: (0, 0)),
            ],
            out_specs=pl.BlockSpec((bt, 1), lambda i: (i, 0)),
        ),
        compiler_params=pltpu.CompilerParams(
            dimension_semantics=("parallel",)),
    )(x, packed["w1"], packed["w2"])
    return y[:B]


# ------------------------ pure-JAX reference --------------------------------

def _actor_ref(x, w1, b1, w2, b2):
    h = jax.nn.relu(jnp.dot(x, w1.T, precision=jax.lax.Precision.HIGHEST) + b1)
    return jax.nn.softmax(
        jnp.dot(h, w2.T, precision=jax.lax.Precision.HIGHEST) + b2, axis=-1)


def model_ref(params, prior, r, is_atk=True):
    B = prior.shape[0]
    dfd_ob = jnp.concatenate([prior, r], axis=1)
    dfd_prob = _actor_ref(dfd_ob, params["dfd_w1"], params["dfd_b1"],
                          params["dfd_w2"], params["dfd_b2"])
    atk_s = []
    for t in range(N_TYPES):
        atk_tp = jnp.zeros((B, N_TYPES)).at[:, t].set(1.0)
        atk_ob = jnp.concatenate([prior, r, atk_tp], axis=1)
        atk_s.append(_actor_ref(atk_ob, params["atk_w1"], params["atk_b1"],
                                params["atk_w2"], params["atk_b2"]))
    y = jnp.zeros((B, 1), jnp.float32)
    for t in range(N_TYPES):
        atk_tp = jnp.zeros((B, N_TYPES)).at[:, t].set(1.0)
        ap = atk_s[t]
        for a in range(N_SLOTS):
            atk_ac = jnp.zeros((B, N_SLOTS)).at[:, a].set(1.0)
            for b in range(N_SLOTS):
                dfd_ac = jnp.zeros((B, N_SLOTS)).at[:, b].set(1.0)
                ob = jnp.concatenate(
                    [prior, r, atk_tp, ap, atk_ac, dfd_prob, dfd_ac], axis=1)
                h = jax.nn.relu(
                    jnp.dot(ob, params["crit_w1"].T,
                            precision=jax.lax.Precision.HIGHEST)
                    + params["crit_b1"])
                c = (jnp.dot(h, params["crit_w2"].T,
                             precision=jax.lax.Precision.HIGHEST)
                     + params["crit_b2"])
                w = ap[:, a:a + 1] * dfd_prob[:, b:b + 1]
                if is_atk:
                    y = y + c * w / N_TYPES
                else:
                    y = y + c * w * prior[:, t:t + 1]
    return y


# ------------------------------- main ----------------------------------------

if __name__ == "__main__":
    key = jax.random.PRNGKey(0)
    k_params, k_prior, k_r = jax.random.split(key, 3)

    params = init_params(k_params)
    packed = pack_params(params)     # weight packing done once, not per call

    B = 8
    prior = jax.nn.softmax(
        jax.random.normal(k_prior, (B, N_TYPES), jnp.float32), axis=-1)
    r = jax.random.uniform(k_r, (B, N_ROUNDS), jnp.float32)

    for is_atk in (True, False):
        y = jax.block_until_ready(model_forward(packed, prior, r, is_atk=is_atk))
        y_ref = jax.block_until_ready(model_ref(params, prior, r, is_atk=is_atk))
        np.testing.assert_allclose(np.asarray(y), np.asarray(y_ref),
                                   rtol=1e-3, atol=1e-3)

    print("KERNEL_OK")
</pallas_src>

<mosaic_0001>
module attributes {stable_mosaic.version = 11 : i64} {
  func.func @model_kernel(%arg0: i32, %arg1: memref<8x3xf32, #tpu.memory_space<vmem>>, %arg2: memref<32x32xf32, #tpu.memory_space<vmem>>, %arg3: memref<32x4xf32, #tpu.memory_space<vmem>>, %arg4: memref<8x1xf32, #tpu.memory_space<vmem>>) attributes {dimension_semantics = [#tpu.dimension_semantics<parallel>], iteration_bounds = array<i64: 1>, scalar_prefetch = 0 : i64, scratch_operands = 0 : i64, tpu.core_type = #tpu.core_type<tc>, window_params = [{transform_indices = @transform_0, window_bounds = array<i64: 8, 3>}, {pipeline_mode = #tpu.pipeline_mode<synchronous>, transform_indices = @transform_1, window_bounds = array<i64: 32, 32>}, {pipeline_mode = #tpu.pipeline_mode<synchronous>, transform_indices = @transform_2, window_bounds = array<i64: 32, 4>}, {transform_indices = @transform_3, window_bounds = array<i64: 8, 1>}]} {
    %c0 = arith.constant 0 : index
    %c0_0 = arith.constant 0 : index
    %0 = vector.load %arg1[%c0, %c0_0] : memref<8x3xf32, #tpu.memory_space<vmem>>, vector<8x3xf32>
    %c0_1 = arith.constant 0 : index
    %c0_2 = arith.constant 0 : index
    %1 = vector.load %arg2[%c0_1, %c0_2] : memref<32x32xf32, #tpu.memory_space<vmem>>, vector<32x32xf32>
    %2 = vector.extract_strided_slice %0 {offsets = [0, 0], sizes = [8, 1], strides = [1, 1]} : vector<8x3xf32> to vector<8x1xf32>
    %3 = vector.extract_strided_slice %0 {offsets = [0, 1], sizes = [8, 1], strides = [1, 1]} : vector<8x3xf32> to vector<8x1xf32>
    %4 = vector.extract_strided_slice %0 {offsets = [0, 2], sizes = [8, 1], strides = [1, 1]} : vector<8x3xf32> to vector<8x1xf32>
    %5 = vector.shape_cast %2 : vector<8x1xf32> to vector<8x1xf32>
    %6 = vector.broadcast %5 : vector<8x1xf32> to vector<8x32xf32>
    %7 = vector.shape_cast %3 : vector<8x1xf32> to vector<8x1xf32>
    %8 = vector.broadcast %7 : vector<8x1xf32> to vector<8x32xf32>
    %9 = vector.shape_cast %4 : vector<8x1xf32> to vector<8x1xf32>
    %10 = vector.broadcast %9 : vector<8x1xf32> to vector<8x32xf32>
    %11 = vector.extract_strided_slice %1 {offsets = [0, 0], sizes = [1, 32], strides = [1, 1]} : vector<32x32xf32> to vector<1x32xf32>
    %12 = vector.broadcast %11 : vector<1x32xf32> to vector<8x32xf32>
    %13 = arith.mulf %6, %12 : vector<8x32xf32>
    %14 = vector.extract_strided_slice %1 {offsets = [1, 0], sizes = [1, 32], strides = [1, 1]} : vector<32x32xf32> to vector<1x32xf32>
    %15 = vector.broadcast %14 : vector<1x32xf32> to vector<8x32xf32>
    %16 = arith.mulf %8, %15 : vector<8x32xf32>
    %17 = arith.addf %13, %16 : vector<8x32xf32>
    %18 = vector.extract_strided_slice %1 {offsets = [2, 0], sizes = [1, 32], strides = [1, 1]} : vector<32x32xf32> to vector<1x32xf32>
    %19 = vector.broadcast %18 : vector<1x32xf32> to vector<8x32xf32>
    %20 = arith.mulf %10, %19 : vector<8x32xf32>
    %21 = arith.addf %17, %20 : vector<8x32xf32>
    %22 = vector.extract_strided_slice %1 {offsets = [3, 0], sizes = [1, 32], strides = [1, 1]} : vector<32x32xf32> to vector<1x32xf32>
    %23 = vector.broadcast %22 : vector<1x32xf32> to vector<8x32xf32>
    %24 = arith.addf %21, %23 : vector<8x32xf32>
    %cst = arith.constant 0.000000e+00 : f32
    %25 = vector.broadcast %cst : f32 to vector<8x32xf32>
    %26 = arith.maximumf %24, %25 : vector<8x32xf32>
    %27 = vector.extract_strided_slice %1 {offsets = [4, 0], sizes = [1, 32], strides = [1, 1]} : vector<32x32xf32> to vector<1x32xf32>
    %28 = vector.broadcast %27 : vector<1x32xf32> to vector<8x32xf32>
    %29 = arith.mulf %6, %28 : vector<8x32xf32>
    %30 = vector.extract_strided_slice %1 {offsets = [5, 0], sizes = [1, 32], strides = [1, 1]} : vector<32x32xf32> to vector<1x32xf32>
    %31 = vector.broadcast %30 : vector<1x32xf32> to vector<8x32xf32>
    %32 = arith.mulf %8, %31 : vector<8x32xf32>
    %33 = arith.addf %29, %32 : vector<8x32xf32>
    %34 = vector.extract_strided_slice %1 {offsets = [6, 0], sizes = [1, 32], strides = [1, 1]} : vector<32x32xf32> to vector<1x32xf32>
    %35 = vector.broadcast %34 : vector<1x32xf32> to vector<8x32xf32>
    %36 = arith.mulf %10, %35 : vector<8x32xf32>
    %37 = arith.addf %33, %36 : vector<8x32xf32>
    %38 = vector.extract_strided_slice %1 {offsets = [7, 0], sizes = [1, 32], strides = [1, 1]} : vector<32x32xf32> to vector<1x32xf32>
    %39 = vector.broadcast %38 : vector<1x32xf32> to vector<8x32xf32>
    %40 = arith.addf %37, %39 : vector<8x32xf32>
    %41 = vector.extract_strided_slice %1 {offsets = [8, 0], sizes = [1, 32], strides = [1, 1]} : vector<32x32xf32> to vector<1x32xf32>
    %42 = vector.broadcast %41 : vector<1x32xf32> to vector<8x32xf32>
    %43 = arith.addf %40, %42 : vector<8x32xf32>
    %cst_3 = arith.constant 0.000000e+00 : f32
    %44 = vector.broadcast %cst_3 : f32 to vector<8x32xf32>
    %45 = arith.maximumf %43, %44 : vector<8x32xf32>
    %46 = vector.extract_strided_slice %1 {offsets = [9, 0], sizes = [1, 32], strides = [1, 1]} : vector<32x32xf32> to vector<1x32xf32>
    %47 = vector.broadcast %46 : vector<1x32xf32> to vector<8x32xf32>
    %48 = arith.addf %40, %47 : vector<8x32xf32>
    %cst_4 = arith.constant 0.000000e+00 : f32
    %49 = vector.broadcast %cst_4 : f32 to vector<8x32xf32>
    %50 = arith.maximumf %48, %49 : vector<8x32xf32>
    %51 = tpu.concatenate %26, %45, %50 in 0 : vector<8x32xf32>, vector<8x32xf32>, vector<8x32xf32> -> vector<24x32xf32>
    %c0_5 = arith.constant 0 : index
    %c0_6 = arith.constant 0 : index
    %52 = vector.load %arg3[%c0_5, %c0_6] : memref<32x4xf32, #tpu.memory_space<vmem>>, vector<32x4xf32>
    %cst_7 = arith.constant dense<0.000000e+00> : vector<24x4xf32>
    %53 = tpu.matmul %51, %52, %cst_7 {dimension_numbers = #tpu.dot_dimension_numbers<[1], [0], [0], [1], [0, 0, 1, 1], [], []>} : vector<24x32xf32>, vector<32x4xf32>, vector<24x4xf32> -> vector<24x4xf32>
    %54 = vector.extract_strided_slice %1 {offsets = [25, 0], sizes = [1, 4], strides = [1, 1]} : vector<32x32xf32> to vector<1x4xf32>
    %55 = vector.broadcast %54 : vector<1x4xf32> to vector<24x4xf32>
    %56 = arith.addf %53, %55 : vector<24x4xf32>
    %57 = vector.extract_strided_slice %56 {offsets = [0, 0], sizes = [8, 2], strides = [1, 1]} : vector<24x4xf32> to vector<8x2xf32>
    %58 = vector.extract_strided_slice %56 {offsets = [8, 2], sizes = [16, 2], strides = [1, 1]} : vector<24x4xf32> to vector<16x2xf32>
    %59 = tpu.concatenate %57, %58 in 0 : vector<8x2xf32>, vector<16x2xf32> -> vector<24x2xf32>
    %cst_8 = arith.constant dense<0xFF800000> : vector<24xf32>
    %60 = vector.multi_reduction <maximumf>, %59, %cst_8 [1] : vector<24x2xf32> to vector<24xf32>
    %61 = vector.shape_cast %60 : vector<24xf32> to vector<24x1xf32>
    %62 = vector.broadcast %61 : vector<24x1xf32> to vector<24x2xf32>
    %63 = arith.subf %59, %62 : vector<24x2xf32>
    %64 = math.exp %63 : vector<24x2xf32>
    %cst_9 = arith.constant dense<0.000000e+00> : vector<24xf32>
    %65 = vector.multi_reduction <add>, %64, %cst_9 [1] : vector<24x2xf32> to vector<24xf32>
    %66 = vector.shape_cast %65 : vector<24xf32> to vector<24x1xf32>
    %67 = vector.broadcast %66 : vector<24x1xf32> to vector<24x2xf32>
    %68 = arith.divf %64, %67 : vector<24x2xf32>
    %69 = vector.extract_strided_slice %68 {offsets = [0, 0], sizes = [8, 2], strides = [1, 1]} : vector<24x2xf32> to vector<8x2xf32>
    %70 = vector.extract_strided_slice %68 {offsets = [8, 0], sizes = [8, 2], strides = [1, 1]} : vector<24x2xf32> to vector<8x2xf32>
    %71 = vector.extract_strided_slice %68 {offsets = [16, 0], sizes = [8, 2], strides = [1, 1]} : vector<24x2xf32> to vector<8x2xf32>
    %72 = vector.extract_strided_slice %1 {offsets = [10, 0], sizes = [1, 32], strides = [1, 1]} : vector<32x32xf32> to vector<1x32xf32>
    %73 = vector.broadcast %72 : vector<1x32xf32> to vector<8x32xf32>
    %74 = arith.mulf %6, %73 : vector<8x32xf32>
    %75 = vector.extract_strided_slice %1 {offsets = [11, 0], sizes = [1, 32], strides = [1, 1]} : vector<32x32xf32> to vector<1x32xf32>
    %76 = vector.broadcast %75 : vector<1x32xf32> to vector<8x32xf32>
    %77 = arith.mulf %8, %76 : vector<8x32xf32>
    %78 = arith.addf %74, %77 : vector<8x32xf32>
    %79 = vector.extract_strided_slice %1 {offsets = [12, 0], sizes = [1, 32], strides = [1, 1]} : vector<32x32xf32> to vector<1x32xf32>
    %80 = vector.broadcast %79 : vector<1x32xf32> to vector<8x32xf32>
    %81 = arith.mulf %10, %80 : vector<8x32xf32>
    %82 = arith.addf %78, %81 : vector<8x32xf32>
    %83 = vector.extract_strided_slice %1 {offsets = [13, 0], sizes = [1, 32], strides = [1, 1]} : vector<32x32xf32> to vector<1x32xf32>
    %84 = vector.broadcast %83 : vector<1x32xf32> to vector<8x32xf32>
    %85 = arith.addf %82, %84 : vector<8x32xf32>
    %86 = vector.extract_strided_slice %69 {offsets = [0, 0], sizes = [8, 1], strides = [1, 1]} : vector<8x2xf32> to vector<8x1xf32>
    %87 = vector.shape_cast %86 : vector<8x1xf32> to vector<8x1xf32>
    %88 = vector.broadcast %87 : vector<8x1xf32> to vector<8x32xf32>
    %89 = vector.extract_strided_slice %1 {offsets = [20, 0], sizes = [1, 32], strides = [1, 1]} : vector<32x32xf32> to vector<1x32xf32>
    %90 = vector.broadcast %89 : vector<1x32xf32> to vector<8x32xf32>
    %91 = arith.mulf %88, %90 : vector<8x32xf32>
    %92 = arith.addf %85, %91 : vector<8x32xf32>
    %93 = vector.extract_strided_slice %69 {offsets = [0, 1], sizes = [8, 1], strides = [1, 1]} : vector<8x2xf32> to vector<8x1xf32>
    %94 = vector.shape_cast %93 : vector<8x1xf32> to vector<8x1xf32>
    %95 = vector.broadcast %94 : vector<8x1xf32> to vector<8x32xf32>
    %96 = vector.extract_strided_slice %1 {offsets = [21, 0], sizes = [1, 32], strides = [1, 1]} : vector<32x32xf32> to vector<1x32xf32>
    %97 = vector.broadcast %96 : vector<1x32xf32> to vector<8x32xf32>
    %98 = arith.mulf %95, %97 : vector<8x32xf32>
    %99 = arith.addf %92, %98 : vector<8x32xf32>
    %100 = vector.extract_strided_slice %1 {offsets = [14, 0], sizes = [1, 32], strides = [1, 1]} : vector<32x32xf32> to vector<1x32xf32>
    %101 = vector.broadcast %100 : vector<1x32xf32> to vector<8x32xf32>
    %102 = arith.addf %99, %101 : vector<8x32xf32>
    %103 = vector.extract_strided_slice %70 {offsets = [0, 0], sizes = [8, 1], strides = [1, 1]} : vector<8x2xf32> to vector<8x1xf32>
    %104 = vector.shape_cast %103 : vector<8x1xf32> to vector<8x1xf32>
    %105 = vector.broadcast %104 : vector<8x1xf32> to vector<8x32xf32>
    %106 = vector.extract_strided_slice %1 {offsets = [16, 0], sizes = [1, 32], strides = [1, 1]} : vector<32x32xf32> to vector<1x32xf32>
    %107 = vector.broadcast %106 : vector<1x32xf32> to vector<8x32xf32>
    %108 = arith.mulf %105, %107 : vector<8x32xf32>
    %109 = arith.addf %102, %108 : vector<8x32xf32>
    %110 = vector.extract_strided_slice %70 {offsets = [0, 1], sizes = [8, 1], strides = [1, 1]} : vector<8x2xf32> to vector<8x1xf32>
    %111 = vector.shape_cast %110 : vector<8x1xf32> to vector<8x1xf32>
    %112 = vector.broadcast %111 : vector<8x1xf32> to vector<8x32xf32>
    %113 = vector.extract_strided_slice %1 {offsets = [17, 0], sizes = [1, 32], strides = [1, 1]} : vector<32x32xf32> to vector<1x32xf32>
    %114 = vector.broadcast %113 : vector<1x32xf32> to vector<8x32xf32>
    %115 = arith.mulf %112, %114 : vector<8x32xf32>
    %116 = arith.addf %109, %115 : vector<8x32xf32>
    %117 = vector.extract_strided_slice %1 {offsets = [18, 0], sizes = [1, 32], strides = [1, 1]} : vector<32x32xf32> to vector<1x32xf32>
    %118 = vector.broadcast %117 : vector<1x32xf32> to vector<8x32xf32>
    %119 = arith.addf %116, %118 : vector<8x32xf32>
    %120 = vector.extract_strided_slice %70 {offsets = [0, 0], sizes = [8, 1], strides = [1, 1]} : vector<8x2xf32> to vector<8x1xf32>
    %cst_10 = arith.constant 5.000000e-01 : f32
    %121 = vector.broadcast %cst_10 : f32 to vector<8x1xf32>
    %122 = arith.mulf %120, %121 : vector<8x1xf32>
    %123 = vector.extract_strided_slice %1 {offsets = [22, 0], sizes = [1, 32], strides = [1, 1]} : vector<32x32xf32> to vector<1x32xf32>
    %124 = vector.broadcast %123 : vector<1x32xf32> to vector<8x32xf32>
    %125 = arith.addf %119, %124 : vector<8x32xf32>
    %cst_11 = arith.constant 0.000000e+00 : f32
    %126 = vector.broadcast %cst_11 : f32 to vector<8x32xf32>
    %127 = arith.maximumf %125, %126 : vector<8x32xf32>
    %128 = vector.extract_strided_slice %69 {offsets = [0, 0], sizes = [8, 1], strides = [1, 1]} : vector<8x2xf32> to vector<8x1xf32>
    %129 = arith.mulf %122, %128 : vector<8x1xf32>
    %130 = vector.extract_strided_slice %1 {offsets = [23, 0], sizes = [1, 32], strides = [1, 1]} : vector<32x32xf32> to vector<1x32xf32>
    %131 = vector.broadcast %130 : vector<1x32xf32> to vector<8x32xf32>
    %132 = arith.addf %119, %131 : vector<8x32xf32>
    %cst_12 = arith.constant 0.000000e+00 : f32
    %133 = vector.broadcast %cst_12 : f32 to vector<8x32xf32>
    %134 = arith.maximumf %132, %133 : vector<8x32xf32>
    %135 = vector.extract_strided_slice %69 {offsets = [0, 1], sizes = [8, 1], strides = [1, 1]} : vector<8x2xf32> to vector<8x1xf32>
    %136 = arith.mulf %122, %135 : vector<8x1xf32>
    %137 = vector.extract_strided_slice %1 {offsets = [19, 0], sizes = [1, 32], strides = [1, 1]} : vector<32x32xf32> to vector<1x32xf32>
    %138 = vector.broadcast %137 : vector<1x32xf32> to vector<8x32xf32>
    %139 = arith.addf %116, %138 : vector<8x32xf32>
    %140 = vector.extract_strided_slice %70 {offsets = [0, 1], sizes = [8, 1], strides = [1, 1]} : vector<8x2xf32> to vector<8x1xf32>
    %cst_13 = arith.constant 5.000000e-01 : f32
    %141 = vector.broadcast %cst_13 : f32 to vector<8x1xf32>
    %142 = arith.mulf %140, %141 : vector<8x1xf32>
    %143 = vector.extract_strided_slice %1 {offsets = [22, 0], sizes = [1, 32], strides = [1, 1]} : vector<32x32xf32> to vector<1x32xf32>
    %144 = vector.broadcast %143 : vector<1x32xf32> to vector<8x32xf32>
    %145 = arith.addf %139, %144 : vector<8x32xf32>
    %cst_14 = arith.constant 0.000000e+00 : f32
    %146 = vector.broadcast %cst_14 : f32 to vector<8x32xf32>
    %147 = arith.maximumf %145, %146 : vector<8x32xf32>
    %148 = vector.extract_strided_slice %69 {offsets = [0, 0], sizes = [8, 1], strides = [1, 1]} : vector<8x2xf32> to vector<8x1xf32>
    %149 = arith.mulf %142, %148 : vector<8x1xf32>
    %150 = vector.extract_strided_slice %1 {offsets = [23, 0], sizes = [1, 32], strides = [1, 1]} : vector<32x32xf32> to vector<1x32xf32>
    %151 = vector.broadcast %150 : vector<1x32xf32> to vector<8x32xf32>
    %152 = arith.addf %139, %151 : vector<8x32xf32>
    %cst_15 = arith.constant 0.000000e+00 : f32
    %153 = vector.broadcast %cst_15 : f32 to vector<8x32xf32>
    %154 = arith.maximumf %152, %153 : vector<8x32xf32>
    %155 = vector.extract_strided_slice %69 {offsets = [0, 1], sizes = [8, 1], strides = [1, 1]} : vector<8x2xf32> to vector<8x1xf32>
    %156 = arith.mulf %142, %155 : vector<8x1xf32>
    %157 = vector.extract_strided_slice %1 {offsets = [15, 0], sizes = [1, 32], strides = [1, 1]} : vector<32x32xf32> to vector<1x32xf32>
    %158 = vector.broadcast %157 : vector<1x32xf32> to vector<8x32xf32>
    %159 = arith.addf %99, %158 : vector<8x32xf32>
    %160 = vector.extract_strided_slice %71 {offsets = [0, 0], sizes = [8, 1], strides = [1, 1]} : vector<8x2xf32> to vector<8x1xf32>
    %161 = vector.shape_cast %160 : vector<8x1xf32> to vector<8x1xf32>
    %162 = vector.broadcast %161 : vector<8x1xf32> to vector<8x32xf32>
    %163 = vector.extract_strided_slice %1 {offsets = [16, 0], sizes = [1, 32], strides = [1, 1]} : vector<32x32xf32> to vector<1x32xf32>
    %164 = vector.broadcast %163 : vector<1x32xf32> to vector<8x32xf32>
    %165 = arith.mulf %162, %164 : vector<8x32xf32>
    %166 = arith.addf %159, %165 : vector<8x32xf32>
    %167 = vector.extract_strided_slice %71 {offsets = [0, 1], sizes = [8, 1], strides = [1, 1]} : vector<8x2xf32> to vector<8x1xf32>
    %168 = vector.shape_cast %167 : vector<8x1xf32> to vector<8x1xf32>
    %169 = vector.broadcast %168 : vector<8x1xf32> to vector<8x32xf32>
    %170 = vector.extract_strided_slice %1 {offsets = [17, 0], sizes = [1, 32], strides = [1, 1]} : vector<32x32xf32> to vector<1x32xf32>
    %171 = vector.broadcast %170 : vector<1x32xf32> to vector<8x32xf32>
    %172 = arith.mulf %169, %171 : vector<8x32xf32>
    %173 = arith.addf %166, %172 : vector<8x32xf32>
    %174 = vector.extract_strided_slice %1 {offsets = [18, 0], sizes = [1, 32], strides = [1, 1]} : vector<32x32xf32> to vector<1x32xf32>
    %175 = vector.broadcast %174 : vector<1x32xf32> to vector<8x32xf32>
    %176 = arith.addf %173, %175 : vector<8x32xf32>
    %177 = vector.extract_strided_slice %71 {offsets = [0, 0], sizes = [8, 1], strides = [1, 1]} : vector<8x2xf32> to vector<8x1xf32>
    %cst_16 = arith.constant 5.000000e-01 : f32
    %178 = vector.broadcast %cst_16 : f32 to vector<8x1xf32>
    %179 = arith.mulf %177, %178 : vector<8x1xf32>
    %180 = vector.extract_strided_slice %1 {offsets = [22, 0], sizes = [1, 32], strides = [1, 1]} : vector<32x32xf32> to vector<1x32xf32>
    %181 = vector.broadcast %180 : vector<1x32xf32> to vector<8x32xf32>
    %182 = arith.addf %176, %181 : vector<8x32xf32>
    %cst_17 = arith.constant 0.000000e+00 : f32
    %183 = vector.broadcast %cst_17 : f32 to vector<8x32xf32>
    %184 = arith.maximumf %182, %183 : vector<8x32xf32>
    %185 = vector.extract_strided_slice %69 {offsets = [0, 0], sizes = [8, 1], strides = [1, 1]} : vector<8x2xf32> to vector<8x1xf32>
    %186 = arith.mulf %179, %185 : vector<8x1xf32>
    %187 = vector.extract_strided_slice %1 {offsets = [23, 0], sizes = [1, 32], strides = [1, 1]} : vector<32x32xf32> to vector<1x32xf32>
    %188 = vector.broadcast %187 : vector<1x32xf32> to vector<8x32xf32>
    %189 = arith.addf %176, %188 : vector<8x32xf32>
    %cst_18 = arith.constant 0.000000e+00 : f32
    %190 = vector.broadcast %cst_18 : f32 to vector<8x32xf32>
    %191 = arith.maximumf %189, %190 : vector<8x32xf32>
    %192 = vector.extract_strided_slice %69 {offsets = [0, 1], sizes = [8, 1], strides = [1, 1]} : vector<8x2xf32> to vector<8x1xf32>
    %193 = arith.mulf %179, %192 : vector<8x1xf32>
    %194 = vector.extract_strided_slice %1 {offsets = [19, 0], sizes = [1, 32], strides = [1, 1]} : vector<32x32xf32> to vector<1x32xf32>
    %195 = vector.broadcast %194 : vector<1x32xf32> to vector<8x32xf32>
    %196 = arith.addf %173, %195 : vector<8x32xf32>
    %197 = vector.extract_strided_slice %71 {offsets = [0, 1], sizes = [8, 1], strides = [1, 1]} : vector<8x2xf32> to vector<8x1xf32>
    %cst_19 = arith.constant 5.000000e-01 : f32
    %198 = vector.broadcast %cst_19 : f32 to vector<8x1xf32>
    %199 = arith.mulf %197, %198 : vector<8x1xf32>
    %200 = vector.extract_strided_slice %1 {offsets = [22, 0], sizes = [1, 32], strides = [1, 1]} : vector<32x32xf32> to vector<1x32xf32>
    %201 = vector.broadcast %200 : vector<1x32xf32> to vector<8x32xf32>
    %202 = arith.addf %196, %201 : vector<8x32xf32>
    %cst_20 = arith.constant 0.000000e+00 : f32
    %203 = vector.broadcast %cst_20 : f32 to vector<8x32xf32>
    %204 = arith.maximumf %202, %203 : vector<8x32xf32>
    %205 = vector.extract_strided_slice %69 {offsets = [0, 0], sizes = [8, 1], strides = [1, 1]} : vector<8x2xf32> to vector<8x1xf32>
    %206 = arith.mulf %199, %205 : vector<8x1xf32>
    %207 = vector.extract_strided_slice %1 {offsets = [23, 0], sizes = [1, 32], strides = [1, 1]} : vector<32x32xf32> to vector<1x32xf32>
    %208 = vector.broadcast %207 : vector<1x32xf32> to vector<8x32xf32>
    %209 = arith.addf %196, %208 : vector<8x32xf32>
    %cst_21 = arith.constant 0.000000e+00 : f32
    %210 = vector.broadcast %cst_21 : f32 to vector<8x32xf32>
    %211 = arith.maximumf %209, %210 : vector<8x32xf32>
    %212 = vector.extract_strided_slice %69 {offsets = [0, 1], sizes = [8, 1], strides = [1, 1]} : vector<8x2xf32> to vector<8x1xf32>
    %213 = arith.mulf %199, %212 : vector<8x1xf32>
    %214 = tpu.concatenate %127, %134, %147, %154, %184, %191, %204, %211 in 0 : vector<8x32xf32>, vector<8x32xf32>, vector<8x32xf32>, vector<8x32xf32>, vector<8x32xf32>, vector<8x32xf32>, vector<8x32xf32>, vector<8x32xf32> -> vector<64x32xf32>
    %215 = tpu.concatenate %129, %136, %149, %156, %186, %193, %206, %213 in 0 : vector<8x1xf32>, vector<8x1xf32>, vector<8x1xf32>, vector<8x1xf32>, vector<8x1xf32>, vector<8x1xf32>, vector<8x1xf32>, vector<8x1xf32> -> vector<64x1xf32>
    %216 = vector.extract_strided_slice %1 {offsets = [24, 0], sizes = [1, 32], strides = [1, 1]} : vector<32x32xf32> to vector<1x32xf32>
    %217 = vector.broadcast %216 : vector<1x32xf32> to vector<64x32xf32>
    %218 = arith.mulf %214, %217 : vector<64x32xf32>
    %cst_22 = arith.constant dense<0.000000e+00> : vector<64xf32>
    %219 = vector.multi_reduction <add>, %218, %cst_22 [1] : vector<64x32xf32> to vector<64xf32>
    %220 = vector.shape_cast %219 : vector<64xf32> to vector<64x1xf32>
    %221 = vector.extract_strided_slice %1 {offsets = [25, 4], sizes = [1, 1], strides = [1, 1]} : vector<32x32xf32> to vector<1x1xf32>
    %222 = vector.broadcast %221 : vector<1x1xf32> to vector<64x1xf32>
    %223 = arith.addf %220, %222 : vector<64x1xf32>
    %224 = arith.mulf %223, %215 : vector<64x1xf32>
    %225 = vector.extract_strided_slice %224 {offsets = [0, 0], sizes = [8, 1], strides = [1, 1]} : vector<64x1xf32> to vector<8x1xf32>
    %226 = vector.extract_strided_slice %224 {offsets = [8, 0], sizes = [8, 1], strides = [1, 1]} : vector<64x1xf32> to vector<8x1xf32>
    %227 = arith.addf %225, %226 : vector<8x1xf32>
    %228 = vector.extract_strided_slice %224 {offsets = [16, 0], sizes = [8, 1], strides = [1, 1]} : vector<64x1xf32> to vector<8x1xf32>
    %229 = arith.addf %227, %228 : vector<8x1xf32>
    %230 = vector.extract_strided_slice %224 {offsets = [24, 0], sizes = [8, 1], strides = [1, 1]} : vector<64x1xf32> to vector<8x1xf32>
    %231 = arith.addf %229, %230 : vector<8x1xf32>
    %232 = vector.extract_strided_slice %224 {offsets = [32, 0], sizes = [8, 1], strides = [1, 1]} : vector<64x1xf32> to vector<8x1xf32>
    %233 = arith.addf %231, %232 : vector<8x1xf32>
    %234 = vector.extract_strided_slice %224 {offsets = [40, 0], sizes = [8, 1], strides = [1, 1]} : vector<64x1xf32> to vector<8x1xf32>
    %235 = arith.addf %233, %234 : vector<8x1xf32>
    %236 = vector.extract_strided_slice %224 {offsets = [48, 0], sizes = [8, 1], strides = [1, 1]} : vector<64x1xf32> to vector<8x1xf32>
    %237 = arith.addf %235, %236 : vector<8x1xf32>
    %238 = vector.extract_strided_slice %224 {offsets = [56, 0], sizes = [8, 1], strides = [1, 1]} : vector<64x1xf32> to vector<8x1xf32>
    %239 = arith.addf %237, %238 : vector<8x1xf32>
    %c0_23 = arith.constant 0 : index
    %c0_24 = arith.constant 0 : index
    %240 = vector.load %arg4[%c0_23, %c0_24] : memref<8x1xf32, #tpu.memory_space<vmem>>, vector<8x1xf32>
    tpu.vector_store %arg4[%c0_23, %c0_24], %239 {strides = array<i32>} : memref<8x1xf32, #tpu.memory_space<vmem>>, vector<8x1xf32>,
    return
  }
  func.func @transform_0(%arg0: i32) -> (i32, i32) {
    %c0_i32 = arith.constant 0 : i32
    %c0_i32_0 = arith.constant 0 : i32
    return %arg0, %c0_i32 : i32, i32
  }
  func.func @transform_1(%arg0: i32) -> (i32, i32) {
    %c0_i32 = arith.constant 0 : i32
    %c0_i32_0 = arith.constant 0 : i32
    %c0_i32_1 = arith.constant 0 : i32
    return %c0_i32, %c0_i32_0 : i32, i32
  }
  func.func @transform_2(%arg0: i32) -> (i32, i32) {
    %c0_i32 = arith.constant 0 : i32
    %c0_i32_0 = arith.constant 0 : i32
    %c0_i32_1 = arith.constant 0 : i32
    return %c0_i32, %c0_i32_0 : i32, i32
  }
  func.func @transform_3(%arg0: i32) -> (i32, i32) {
    %c0_i32 = arith.constant 0 : i32
    %c0_i32_0 = arith.constant 0 : i32
    return %arg0, %c0_i32 : i32, i32
  }
}

</mosaic_0001>

<llo_original>
// kernel: model_forward.1
$region0: #{model_forward.1}
  #allocation0 [shape = 'u32[]', space=smem, size = 0x4, offset = 0x4, fixed_abs, tag = 'smem constant byte address 0x4 - core index']
  #allocation1 [shape = 'u32[144,128]{1,0:T(1,128)}', space=vmem, size = 0x12000, scoped, tag = 'internal scratch']
  %s0 = inlined_call_operand.vmem [shape: f32[8,3], index: 0, kind: input, shape index: {}]
  %s1 = inlined_call_operand.vmem [shape: f32[32,32], index: 1, kind: input, shape index: {}]
  %s2 = inlined_call_operand.vmem [shape: f32[32,4], index: 2, kind: input, shape index: {}]
  %s3 = inlined_call_operand.vmem [shape: f32[8,1], index: 3, kind: output, shape index: {}]
  %s4 = sld [smem:[#allocation0]]
  $region22: #{model_forward.1} parent=0
    _
  %s6 = ssub.s32 1, %s4
  %s7 = scalar_select 0, %s6, %s4
  // Predicated region
  $region2: #{model_forward.1} parent=0 // pred_check
    _
  $region3: #{model_forward.1} parent=0 // pred_check_branch
    %9 = sbr.rel (0) target = $region5
  $region4: #{model_forward.1} parent=0 // pred_region
    _
  $region5: #{model_forward.1} parent=0 // pred_fallthru
    _
  // Predicated region
  $region6: #{model_forward.1} parent=0 // pred_check
    _
  $region7: #{model_forward.1} parent=0 // pred_check_branch
    %11 = sbr.rel (0) target = $region9
  $region8: #{model_forward.1} parent=0 // pred_region
    _
  $region9: #{model_forward.1} parent=0 // pred_fallthru
    _
  // Predicated region
  $region10: #{model_forward.1} parent=0 // pred_check
    _
  $region11: #{model_forward.1} parent=0 // pred_check_branch
    %13 = sbr.rel (0) target = $region13
  $region12: #{model_forward.1} parent=0 // pred_region
    _
  $region13: #{model_forward.1} parent=0 // pred_fallthru
    _
  %v14 = vld [vmem:[%s0] sm:$0xff]
  %v15 = vld [vmem:[%s1] sm:$0xff]
  %v16 = vld [vmem:[%s1 + $0x8] sm:$0xff]
  %v17 = vld [vmem:[%s1 + $0x10] sm:$0xff]
  %v18 = vld [vmem:[%s1 + $0x18] sm:$0xff]
  %20 = vset.pattern.permute.xlu0 0
  %21 = vperm.xlu0 %20, %v14
  %v22 = vpop.permute.xlu0 %21
  %24 = vset.pattern.permute.xlu0 1
  %25 = vperm.xlu0 %24, %v14
  %v26 = vpop.permute.xlu0 %25
  %28 = vset.pattern.permute.xlu0 2
  %29 = vperm.xlu0 %28, %v14
  %v30 = vpop.permute.xlu0 %29
  %v32 = vlaneseq
  %v33 = vshrl.u32 %v32, 7
  %v34 = vsub.s32 0, %v33
  %v35 = vrot.slane %v15, %v34
  %v36 = vmul.f32 %v22, %v35
  %v37 = vlaneseq
  %v38 = vshrl.u32 %v37, 7
  %v39 = vsub.s32 1, %v38
  %v40 = vrot.slane %v15, %v39
  %v41 = vmul.f32 %v26, %v40
  %v42 = vadd.f32 %v36, %v41
  %v43 = vlaneseq
  %v44 = vshrl.u32 %v43, 7
  %v45 = vsub.s32 2, %v44
  %v46 = vrot.slane %v15, %v45
  %v47 = vmul.f32 %v30, %v46
  %v48 = vadd.f32 %v42, %v47
  %v49 = vlaneseq
  %v50 = vshrl.u32 %v49, 7
  %v51 = vsub.s32 3, %v50
  %v52 = vrot.slane %v15, %v51
  %v53 = vadd.f32 %v48, %v52
  %v54 = vmax.f32 %v53, 0.0
  %v55 = vlaneseq
  %v56 = vshrl.u32 %v55, 7
  %v57 = vsub.s32 4, %v56
  %v58 = vrot.slane %v15, %v57
  %v59 = vmul.f32 %v22, %v58
  %v60 = vlaneseq
  %v61 = vshrl.u32 %v60, 7
  %v62 = vsub.s32 5, %v61
  %v63 = vrot.slane %v15, %v62
  %v64 = vmul.f32 %v26, %v63
  %v65 = vadd.f32 %v59, %v64
  %v66 = vlaneseq
  %v67 = vshrl.u32 %v66, 7
  %v68 = vsub.s32 6, %v67
  %v69 = vrot.slane %v15, %v68
  %v70 = vmul.f32 %v30, %v69
  %v71 = vadd.f32 %v65, %v70
  %v72 = vlaneseq
  %v73 = vshrl.u32 %v72, 7
  %v74 = vsub.s32 7, %v73
  %v75 = vrot.slane %v15, %v74
  %v76 = vadd.f32 %v71, %v75
  %v77 = vlaneseq
  %v78 = vshrl.u32 %v77, 7
  %v79 = vsub.s32 0, %v78
  %v80 = vrot.slane %v16, %v79
  %v81 = vadd.f32 %v76, %v80
  %v82 = vmax.f32 %v81, 0.0
  %v83 = vlaneseq
  %v84 = vshrl.u32 %v83, 7
  %v85 = vsub.s32 1, %v84
  %v86 = vrot.slane %v16, %v85
  %v87 = vadd.f32 %v76, %v86
  %v88 = vmax.f32 %v87, 0.0
  %v89 = vld [vmem:[%s2] sm:$0xff]
  %v90 = vld [vmem:[%s2 + $0x8] sm:$0xff]
  %v91 = vld [vmem:[%s2 + $0x10] sm:$0xff]
  %v92 = vld [vmem:[%s2 + $0x18] sm:$0xff]
  %v93 = vlaneseq
  %v94 = vshrl.u32 %v93, 7
  %v95 = vsub.s32 1, %v94
  %v96 = vrot.slane %v18, %v95
  %vm97 = vcmask 261120
  %v99 = vsel %vm97, %v54, 0
  %v102 = vsel %vm97, %v82, 0
  %v105 = vsel %vm97, %v88, 0
  %107 = vmatprep.subr.mxu0 0.0
  %108 = vmatpush1.msra.mxu0 %v89
  %109 = vmatprep.subr.mxu0 0.0
  %110 = vmatpush1.msra.mxu0 %v90
  %111 = vmatprep.subr.mxu0 0.0
  %112 = vmatpush1.msra.mxu0 %v91
  %113 = vmatprep.subr.mxu0 0.0
  %114 = vmatpush1.msra.mxu0 %v92
  %115 = vmatprep.subr.mxu0 0.0
  %116 = vmatpush1.msra.mxu0 0.0
  %117 = vmatprep.subr.mxu0 0.0
  %118 = vmatpush1.msra.mxu0 0.0
  %119 = vmatprep.subr.mxu0 0.0
  %120 = vmatpush1.msra.mxu0 0.0
  %121 = vmatprep.subr.mxu0 0.0
  %122 = vmatpush1.msra.mxu0 0.0
  %123 = vmatprep.subr.mxu0 0.0
  %124 = vmatpush1.msra.mxu0 0.0
  %125 = vmatprep.subr.mxu0 0.0
  %126 = vmatpush1.msra.mxu0 0.0
  %127 = vmatprep.subr.mxu0 0.0
  %128 = vmatpush1.msra.mxu0 0.0
  %129 = vmatprep.subr.mxu0 0.0
  %130 = vmatpush1.msra.mxu0 0.0
  %131 = vmatprep.subr.mxu0 0.0
  %132 = vmatpush1.msra.mxu0 0.0
  %133 = vmatprep.subr.mxu0 0.0
  %134 = vmatpush1.msra.mxu0 0.0
  %135 = vmatprep.subr.mxu0 0.0
  %136 = vmatpush1.msra.mxu0 0.0
  %137 = vmatprep.subr.mxu0 0.0
  %138 = vmatpush1.msra.mxu0 0.0
  %139 = vmatprep.subr.mxu0 0.0
  %140 = vmatpush1.msra.mxu0 0.0
  %141 = vmatprep.subr.mxu0 0.0
  %142 = vmatpush1.msra.mxu0 0.0
  %143 = vmatprep.subr.mxu0 0.0
  %144 = vmatpush1.msra.mxu0 0.0
  %145 = vmatprep.subr.mxu0 0.0
  %146 = vmatpush1.msra.mxu0 0.0
  %147 = vmatprep.subr.mxu0 0.0
  %148 = vmatpush1.msra.mxu0 0.0
  %149 = vmatprep.subr.mxu0 0.0
  %150 = vmatpush1.msra.mxu0 0.0
  %151 = vmatprep.subr.mxu0 0.0
  %152 = vmatpush1.msra.mxu0 0.0
  %153 = vmatprep.subr.mxu0 0.0
  %154 = vmatpush1.msra.mxu0 0.0
  %155 = vmatprep.subr.mxu0 0.0
  %156 = vmatpush1.msra.mxu0 0.0
  %157 = vmatprep.subr.mxu0 0.0
  %158 = vmatpush1.msra.mxu0 0.0
  %159 = vmatprep.subr.mxu0 0.0
  %160 = vmatpush1.msra.mxu0 0.0
  %161 = vmatprep.subr.mxu0 0.0
  %162 = vmatpush1.msra.mxu0 0.0
  %163 = vmatprep.subr.mxu0 0.0
  %164 = vmatpush1.msra.mxu0 0.0
  %165 = vmatprep.subr.mxu0 0.0
  %166 = vmatpush1.msra.mxu0 0.0
  %167 = vmatprep.subr.mxu0 0.0
  %168 = vmatpush1.msra.mxu0 0.0
  %169 = vmatprep.subr.mxu0 0.0
  %170 = vmatpush1.msra.mxu0 0.0
  %171 = vmatprep.mubr.f32.mxu0 0.0
  %172 = vmatmul.mubr.f32.gmra.mrb[0].mxu0 %v99
  %v173 = vpop.f32.mrb[0].mxu0
  %v174 = vadd.f32 %v96, %v173
  %v175 = vpop.f32.mrb[0].mxu0
  %176 = vmatprep.mubr.f32.mxu0 0.0
  %177 = vmatmul.mubr.f32.gmra.mrb[0].mxu0 %v102
  %v178 = vpop.f32.mrb[0].mxu0
  %v179 = vadd.f32 %v96, %v178
  %v180 = vpop.f32.mrb[0].mxu0
  %181 = vmatprep.mubr.f32.mxu0 0.0
  %182 = vmatmul.mubr.f32.gmra.mrb[0].mxu0 %v105
  %v183 = vpop.f32.mrb[0].mxu0
  %v184 = vadd.f32 %v96, %v183
  %v185 = vpop.f32.mrb[0].mxu0
  %186 = vdwg.mxu0
  %189 = vrot.lane.b32.xlu0 %v179, 126
  %v190 = vpop.permute.xlu0 %189
  %191 = vrot.lane.b32.xlu0 %v184, 126
  %v192 = vpop.permute.xlu0 %191
  %vm195 = vcmask 15360
  %v196 = vsel %vm195, %v174, -inf
  %197 = vmax.xlane.f32.xlu0 %v196
  %v198 = vpop.xlane.xlu0 %197
  %v199 = vsel %vm195, %v190, -inf
  %200 = vmax.xlane.f32.xlu0 %v199
  %v201 = vpop.xlane.xlu0 %200
  %v202 = vsel %vm195, %v192, -inf
  %203 = vmax.xlane.f32.xlu0 %v202
  %v204 = vpop.xlane.xlu0 %203
  %v205 = vsub.f32 %v174, %v198
  %v206 = vsub.f32 %v190, %v201
  %v207 = vsub.f32 %v192, %v204
  %v208 = vmul.f32 %v205, 1.442695
  %v209 = vpow.pop %v208
  %v210 = vmul.f32 %v206, 1.442695
  %v211 = vpow.pop %v210
  %v212 = vmul.f32 %v207, 1.442695
  %v213 = vpow.pop %v212
  %v214 = vsel %vm195, %v209, 0.0
  %215 = vadd.xlane.f32.xlu0 %v214
  %v216 = vpop.xlane.xlu0 %215
  %v217 = vsel %vm195, %v211, 0.0
  %218 = vadd.xlane.f32.xlu0 %v217
  %v219 = vpop.xlane.xlu0 %218
  %v220 = vsel %vm195, %v213, 0.0
  %221 = vadd.xlane.f32.xlu0 %v220
  %v222 = vpop.xlane.xlu0 %221
  %v223 = vrcp.pop %v216
  %v224 = vmul.f32 %v209, %v223
  %v225 = vrcp.pop %v219
  %v226 = vmul.f32 %v211, %v225
  %v227 = vrcp.pop %v222
  %v228 = vmul.f32 %v213, %v227
  %v229 = vlaneseq
  %v230 = vshrl.u32 %v229, 7
  %v231 = vsub.s32 2, %v230
  %v232 = vrot.slane %v16, %v231
  %v233 = vmul.f32 %v22, %v232
  %v234 = vlaneseq
  %v235 = vshrl.u32 %v234, 7
  %v236 = vsub.s32 3, %v235
  %v237 = vrot.slane %v16, %v236
  %v238 = vmul.f32 %v26, %v237
  %v239 = vadd.f32 %v233, %v238
  %v240 = vlaneseq
  %v241 = vshrl.u32 %v240, 7
  %v242 = vsub.s32 4, %v241
  %v243 = vrot.slane %v16, %v242
  %v244 = vmul.f32 %v30, %v243
  %v245 = vadd.f32 %v239, %v244
  %v246 = vlaneseq
  %v247 = vshrl.u32 %v246, 7
  %v248 = vsub.s32 5, %v247
  %v249 = vrot.slane %v16, %v248
  %v250 = vadd.f32 %v245, %v249
  %252 = vset.pattern.permute.xlu0 0
  %253 = vperm.xlu0 %252, %v224
  %v254 = vpop.permute.xlu0 %253
  %v256 = vlaneseq
  %v257 = vshrl.u32 %v256, 7
  %v258 = vsub.s32 4, %v257
  %v259 = vrot.slane %v17, %v258
  %v260 = vmul.f32 %v254, %v259
  %v261 = vadd.f32 %v250, %v260
  %262 = vset.pattern.permute.xlu0 1
  %263 = vperm.xlu0 %262, %v224
  %v264 = vpop.permute.xlu0 %263
  %v266 = vlaneseq
  %v267 = vshrl.u32 %v266, 7
  %v268 = vsub.s32 5, %v267
  %v269 = vrot.slane %v17, %v268
  %v270 = vmul.f32 %v264, %v269
  %v271 = vadd.f32 %v261, %v270
  %v272 = vlaneseq
  %v273 = vshrl.u32 %v272, 7
  %v274 = vsub.s32 6, %v273
  %v275 = vrot.slane %v16, %v274
  %v276 = vadd.f32 %v271, %v275
  %278 = vset.pattern.permute.xlu0 0
  %279 = vperm.xlu0 %278, %v226
  %v280 = vpop.permute.xlu0 %279
  %v282 = vlaneseq
  %v283 = vshrl.u32 %v282, 7
  %v284 = vsub.s32 0, %v283
  %v285 = vrot.slane %v17, %v284
  %v286 = vmul.f32 %v280, %v285
  %v287 = vadd.f32 %v276, %v286
  %288 = vset.pattern.permute.xlu0 1
  %289 = vperm.xlu0 %288, %v226
  %v290 = vpop.permute.xlu0 %289
  %v292 = vlaneseq
  %v293 = vshrl.u32 %v292, 7
  %v294 = vsub.s32 1, %v293
  %v295 = vrot.slane %v17, %v294
  %v296 = vmul.f32 %v290, %v295
  %v297 = vadd.f32 %v287, %v296
  %v298 = vlaneseq
  %v299 = vshrl.u32 %v298, 7
  %v300 = vsub.s32 2, %v299
  %v301 = vrot.slane %v17, %v300
  %v302 = vadd.f32 %v297, %v301
  %v303 = vmul.f32 %v226, 0.5
  %v304 = vlaneseq
  %v305 = vshrl.u32 %v304, 7
  %v306 = vsub.s32 6, %v305
  %v307 = vrot.slane %v17, %v306
  %v308 = vadd.f32 %v302, %v307
  %v309 = vmax.f32 %v308, 0.0
  %v310 = vmul.f32 %v303, %v224
  %v311 = vlaneseq
  %v312 = vshrl.u32 %v311, 7
  %v313 = vsub.s32 7, %v312
  %v314 = vrot.slane %v17, %v313
  %v315 = vadd.f32 %v302, %v314
  %v316 = vmax.f32 %v315, 0.0
  %317 = vrot.lane.b32.xlu0 %v224, 127
  %v318 = vpop.permute.xlu0 %317
  %v320 = vmul.f32 %v303, %v318
  %v321 = vlaneseq
  %v322 = vshrl.u32 %v321, 7
  %v323 = vsub.s32 3, %v322
  %v324 = vrot.slane %v17, %v323
  %v325 = vadd.f32 %v297, %v324
  %v326 = vadd.f32 %v325, %v307
  %v327 = vmax.f32 %v326, 0.0
  %328 = vrot.lane.b32.xlu0 %v224, 1
  %v329 = vpop.permute.xlu0 %328
  %v331 = vmul.f32 %v303, %v329
  %v332 = vadd.f32 %v325, %v314
  %v333 = vmax.f32 %v332, 0.0
  %v334 = vlaneseq
  %v335 = vshrl.u32 %v334, 7
  %v336 = vsub.s32 7, %v335
  %v337 = vrot.slane %v16, %v336
  %v338 = vadd.f32 %v271, %v337
  %340 = vset.pattern.permute.xlu0 0
  %341 = vperm.xlu0 %340, %v228
  %v342 = vpop.permute.xlu0 %341
  %v344 = vmul.f32 %v342, %v285
  %v345 = vadd.f32 %v338, %v344
  %346 = vset.pattern.permute.xlu0 1
  %347 = vperm.xlu0 %346, %v228
  %v348 = vpop.permute.xlu0 %347
  %v350 = vmul.f32 %v348, %v295
  %v351 = vadd.f32 %v345, %v350
  %v352 = vadd.f32 %v351, %v301
  %v353 = vmul.f32 %v228, 0.5
  %v354 = vadd.f32 %v352, %v307
  %v355 = vmax.f32 %v354, 0.0
  %v356 = vmul.f32 %v353, %v224
  %v357 = vadd.f32 %v352, %v314
  %v358 = vmax.f32 %v357, 0.0
  %v359 = vmul.f32 %v353, %v318
  %v360 = vadd.f32 %v351, %v324
  %v361 = vadd.f32 %v360, %v307
  %v362 = vmax.f32 %v361, 0.0
  %v363 = vmul.f32 %v353, %v329
  %v364 = vadd.f32 %v360, %v314
  %v365 = vmax.f32 %v364, 0.0
  %367 = vrot.lane.b32.xlu0 %v331, 127
  %v368 = vpop.permute.xlu0 %367
  %370 = vrot.lane.b32.xlu0 %v310, 127
  %v371 = vpop.permute.xlu0 %370
  %373 = vrot.lane.b32.xlu0 %v363, 127
  %v374 = vpop.permute.xlu0 %373
  %376 = vrot.lane.b32.xlu0 %v356, 127
  %v377 = vpop.permute.xlu0 %376
  %v378 = vlaneseq
  %v379 = vshrl.u32 %v378, 7
  %v380 = vsub.s32 0, %v379
  %v381 = vrot.slane %v18, %v380
  %v382 = vmul.f32 %v309, %v381
  %v383 = vmul.f32 %v316, %v381
  %v384 = vmul.f32 %v327, %v381
  %v385 = vmul.f32 %v333, %v381
  %v386 = vmul.f32 %v355, %v381
  %v387 = vmul.f32 %v358, %v381
  %v388 = vmul.f32 %v362, %v381
  %v389 = vmul.f32 %v365, %v381
  %v390 = vsel %vm97, %v382, 0.0
  %391 = vadd.xlane.f32.xlu0 %v390
  %v392 = vpop.xlane.xlu0 %391
  %v393 = vsel %vm97, %v383, 0.0
  %394 = vadd.xlane.f32.xlu0 %v393
  %v395 = vpop.xlane.xlu0 %394
  %v396 = vsel %vm97, %v384, 0.0
  %397 = vadd.xlane.f32.xlu0 %v396
  %v398 = vpop.xlane.xlu0 %397
  %v399 = vsel %vm97, %v385, 0.0
  %400 = vadd.xlane.f32.xlu0 %v399
  %v401 = vpop.xlane.xlu0 %400
  %v402 = vsel %vm97, %v386, 0.0
  %403 = vadd.xlane.f32.xlu0 %v402
  %v404 = vpop.xlane.xlu0 %403
  %v405 = vsel %vm97, %v387, 0.0
  %406 = vadd.xlane.f32.xlu0 %v405
  %v407 = vpop.xlane.xlu0 %406
  %v408 = vsel %vm97, %v388, 0.0
  %409 = vadd.xlane.f32.xlu0 %v408
  %v410 = vpop.xlane.xlu0 %409
  %v411 = vsel %vm97, %v389, 0.0
  %412 = vadd.xlane.f32.xlu0 %v411
  %v413 = vpop.xlane.xlu0 %412
  %v414 = vadd.f32 %v392, %v96
  %v415 = vadd.f32 %v395, %v96
  %v416 = vadd.f32 %v398, %v96
  %v417 = vadd.f32 %v401, %v96
  %v418 = vadd.f32 %v404, %v96
  %v419 = vadd.f32 %v407, %v96
  %v420 = vadd.f32 %v410, %v96
  %v421 = vadd.f32 %v413, %v96
  %424 = vrot.lane.b32.xlu0 %v310, 4
  %v425 = vpop.permute.xlu0 %424
  %426 = vrot.lane.b32.xlu0 %v320, 4
  %v427 = vpop.permute.xlu0 %426
  %428 = vrot.lane.b32.xlu0 %v368, 4
  %v429 = vpop.permute.xlu0 %428
  %430 = vrot.lane.b32.xlu0 %v371, 4
  %v431 = vpop.permute.xlu0 %430
  %432 = vrot.lane.b32.xlu0 %v356, 4
  %v433 = vpop.permute.xlu0 %432
  %434 = vrot.lane.b32.xlu0 %v359, 4
  %v435 = vpop.permute.xlu0 %434
  %436 = vrot.lane.b32.xlu0 %v374, 4
  %v437 = vpop.permute.xlu0 %436
  %438 = vrot.lane.b32.xlu0 %v377, 4
  %v439 = vpop.permute.xlu0 %438
  %v448 = vmul.f32 %v414, %v425
  %v449 = vmul.f32 %v415, %v427
  %v450 = vmul.f32 %v416, %v429
  %v451 = vmul.f32 %v417, %v431
  %v452 = vmul.f32 %v418, %v433
  %v453 = vmul.f32 %v419, %v435
  %v454 = vmul.f32 %v420, %v437
  %v455 = vmul.f32 %v421, %v439
  %v456 = vadd.f32 %v448, %v449
  %v457 = vadd.f32 %v456, %v450
  %v458 = vadd.f32 %v457, %v451
  %v459 = vadd.f32 %v458, %v452
  %v460 = vadd.f32 %v459, %v453
  %v461 = vadd.f32 %v460, %v454
  %v462 = vadd.f32 %v461, %v455
  %464 = vrot.lane.b32.xlu0 %v462, 124
  %v465 = vpop.permute.xlu0 %464
  %vm467 = vcmask 7168
  %468 = vst.msk [vmem:[%s3] sm:$0xff] %vm467, %v465
  // Predicated region
  $region14: #{model_forward.1} parent=0 // pred_check
    _
  $region15: #{model_forward.1} parent=0 // pred_check_branch
    %470 = sbr.rel (0) target = $region17
  $region16: #{model_forward.1} parent=0 // pred_region
    _
  $region17: #{model_forward.1} parent=0 // pred_fallthru
    _
  // Predicated region
  $region18: #{model_forward.1} parent=0 // pred_check
    _
  $region19: #{model_forward.1} parent=0 // pred_check_branch
    %472 = sbr.rel (0) target = $region21
  $region20: #{model_forward.1} parent=0 // pred_region
    _
  $region21: #{model_forward.1} parent=0 // pred_fallthru
    _

</llo_original>
